<compile_context>
chip_gen: v7x
topology: tpu7x:2x2x1
jax: 0.10.0
libtpu: 0.0.40
codegen_flags: <defaults>
</compile_context>

<pallas_src>
import functools

import jax
import jax.numpy as jnp
from jax.experimental import pallas as pl
from jax.experimental.pallas import tpu as pltpu


_SENTINEL = 1e15  # padded coordinate -> huge distance -> exp(-dist) == 0 exactly


def _round_up(x, m):
    return ((x + m - 1) // m) * m


def _apply_mask(val, *masks):
    """Zero out entries where any provided (non-None) mask is False."""
    live = [m for m in masks if m is not None]
    if not live:
        return val
    acc = live[0]
    for m in live[1:]:
        acc = acc & m
    return jnp.where(acc, val, 0.0)


def _sum_keepdims_111(x):
    """Stepwise single-axis reductions of a rank-3 tile down to (1,1,1)."""
    x = jnp.sum(x, axis=2, keepdims=True)
    x = jnp.sum(x, axis=1, keepdims=True)
    x = jnp.sum(x, axis=0, keepdims=True)
    return x


def _soft_hausdorff_kernel(pred_ref, gt_ref, out_ref, *scratch, n, m, k,
                           bb, mp, tk, num_kt, n_padded):
    """One batch chunk x one K tile.

    pred_ref: (Bb, Mp, 2)   alpha-scaled, sentinel-padded, M on sublanes
    gt_ref:   (Bb, 2, TK)   alpha-scaled, sentinel-padded, K on lanes
    out_ref:  (1, 1, 1)     per-chunk partial loss
    scratch (only when num_kt > 1):
      lse0_acc: (Bb, 1, TK)  accumulated per-column lse over M
      l1:       (Bb, Mp, 1)  running sum of exp over K
    """
    g = pl.program_id(0)

    pred = pred_ref[...]                        # (Bb, Mp, 2)
    gt = gt_ref[...]                            # (Bb, 2, TK)
    px = pred[:, :, 0:1]                        # (Bb, Mp, 1)
    py = pred[:, :, 1:2]
    gx = gt[:, 0:1, :]                          # (Bb, 1, TK)
    gy = gt[:, 1:2, :]

    dx = px - gx                                # (Bb, Mp, TK)
    dy = py - gy
    s = -jnp.sqrt(dx * dx + dy * dy)            # == -alpha*d (alpha pre-folded), <= 0
    e = jnp.exp(s)                              # single exp; padded entries are exactly 0

    # Boundary masks only on the small reduced shapes; pruned at trace time.
    bat_ok = None
    if n_padded > n:
        bat_ids = jax.lax.broadcasted_iota(jnp.int32, (bb, 1, 1), 0) + g * bb
        bat_ok = bat_ids < n
    row_ok = None
    if mp > m:
        row_ok = jax.lax.broadcasted_iota(jnp.int32, (1, mp, 1), 1) < m
    k_padded = tk * num_kt

    sum_m = jnp.sum(e, axis=1, keepdims=True)   # (Bb, 1, TK)  LSE over M (complete)
    sum_k = jnp.sum(e, axis=2, keepdims=True)   # (Bb, Mp, 1)  partial LSE over K

    c0 = 1.0 / (n * k)   # mean over (N, K)
    c1 = 1.0 / (n * m)   # mean over (N, M)

    if num_kt == 1:
        # Statically specialized single-pass path: no scratch, no pl.when.
        col_ok = None
        if k_padded > k:
            col_ok = jax.lax.broadcasted_iota(jnp.int32, (1, 1, tk), 2) < k
        lse0 = _apply_mask(jnp.log(sum_m), col_ok, bat_ok)
        lse1 = _apply_mask(jnp.log(sum_k), row_ok, bat_ok)
        out_ref[...] = -(_sum_keepdims_111(lse0) * c0
                         + _sum_keepdims_111(lse1) * c1)
    else:
        lse0_acc_ref, l1_ref = scratch
        kt = pl.program_id(1)

        @pl.when(kt == 0)
        def _init():
            lse0_acc_ref[...] = jnp.zeros_like(lse0_acc_ref)
            l1_ref[...] = jnp.zeros_like(l1_ref)

        col_ok = None
        if k_padded > k:
            col_ok = (jax.lax.broadcasted_iota(jnp.int32, (1, 1, tk), 2)
                      + kt * tk) < k
        # Lane-wide accumulation; reduce-to-scalar happens once, at the end.
        lse0_acc_ref[...] += _apply_mask(jnp.log(sum_m), col_ok, bat_ok)
        # Plain running sum (s <= 0 so no running max / rescale needed).
        l1_ref[...] += sum_k

        @pl.when(kt == num_kt - 1)
        def _finalize():
            lse1 = _apply_mask(jnp.log(l1_ref[...]), row_ok, bat_ok)
            out_ref[...] = -(_sum_keepdims_111(lse0_acc_ref[...]) * c0
                             + _sum_keepdims_111(lse1) * c1)


def soft_hausdorff_loss(pred_points, gt_points, alpha=5.0, *,
                        block_b=None, block_k=None):
    """pred_points: (N, M, 2), gt_points: (N, K, 2) -> scalar loss."""
    pred_points = jnp.asarray(pred_points, jnp.float32)
    gt_points = jnp.asarray(gt_points, jnp.float32)
    N, M, two = pred_points.shape
    _, K, _ = gt_points.shape
    assert two == 2

    Mp = _round_up(M, 8)

    # VMEM budget: generation aware (v7x: 64 MiB/TC -> ~48 MiB; v5e/v6e:
    # 128 MiB -> ~96 MiB).  Leave headroom for compiler-internal scratch.
    try:
        vmem_cap = int(pltpu.get_tpu_info().vmem_capacity_bytes)
    except Exception:
        vmem_cap = 64 << 20
    vmem_limit = int(min(max(vmem_cap * 3 // 4, 32 << 20), 100 << 20))

    # K tile: lane-dense (multiple of 128); bigger tiles on big-VMEM chips.
    tk_cap = 1024 if vmem_limit >= (64 << 20) else 512
    if block_k is None:
        TK = min(_round_up(K, 128), tk_cap)
    else:
        TK = _round_up(block_k, 128)
    Kp = _round_up(K, TK)
    num_kt = Kp // TK

    # Batch chunk: ~4 live (Bb, Mp, TK) f32 temporaries (dx, dy, s, exp(s)).
    if block_b is None:
        per_b = 4 * Mp * TK * 4
        Bb = int(max(1, min(N, (vmem_limit // 4) // per_b, 64)))
        # Keep >= 2 chunks so the leading "parallel" axis can shard across
        # both TensorCores on v7x (negligible cost on 1-TC v5e/v6e).
        Bb = max(1, min(Bb, -(-N // 2)))
    else:
        Bb = int(max(1, min(block_b, N)))
    Np = _round_up(N, Bb)
    G = Np // Bb

    # Fold alpha into the coordinates (O(N*(M+K)) wrapper work removes one
    # per-element multiply over the full (N, M, K) volume in the kernel).
    pred_s = pred_points * jnp.float32(alpha)
    gt_s = gt_points * jnp.float32(alpha)

    # Sentinel padding: padded rows / columns / batch entries get huge
    # coordinates so exp(-dist) == 0 exactly -> no per-element mask needed.
    pred_p = jnp.pad(pred_s, ((0, Np - N), (0, Mp - M), (0, 0)),
                     constant_values=_SENTINEL)
    gt_t = jnp.transpose(gt_s, (0, 2, 1))                  # (N, 2, K)
    gt_p = jnp.pad(gt_t, ((0, Np - N), (0, 0), (0, Kp - K)),
                   constant_values=_SENTINEL)

    kernel = functools.partial(
        _soft_hausdorff_kernel, n=N, m=M, k=K, bb=Bb, mp=Mp, tk=TK,
        num_kt=num_kt, n_padded=Np)

    if num_kt == 1:
        grid = (G,)
        in_specs = [pl.BlockSpec((Bb, Mp, 2), lambda g: (g, 0, 0)),
                    pl.BlockSpec((Bb, 2, TK), lambda g: (g, 0, 0))]
        out_specs = pl.BlockSpec((1, 1, 1), lambda g: (g, 0, 0))
        scratch_shapes = []
        dim_sem = ("parallel",)
    else:
        grid = (G, num_kt)
        in_specs = [pl.BlockSpec((Bb, Mp, 2), lambda g, kt: (g, 0, 0)),
                    pl.BlockSpec((Bb, 2, TK), lambda g, kt: (g, 0, kt))]
        out_specs = pl.BlockSpec((1, 1, 1), lambda g, kt: (g, 0, 0))
        scratch_shapes = [
            pltpu.VMEM((Bb, 1, TK), jnp.float32),   # per-column lse-over-M acc
            pltpu.VMEM((Bb, Mp, 1), jnp.float32),   # running sum(exp) over K
        ]
        dim_sem = ("parallel", "arbitrary")

    cost = pl.CostEstimate(
        flops=8 * N * M * K,
        transcendentals=2 * N * M * K,              # sqrt + exp per element
        bytes_accessed=pred_p.size * 4 + gt_p.size * 4 + G * 4)

    out = pl.pallas_call(
        kernel,
        out_shape=jax.ShapeDtypeStruct((G, 1, 1), jnp.float32),
        grid_spec=pltpu.PrefetchScalarGridSpec(
            num_scalar_prefetch=0,
            grid=grid,
            in_specs=in_specs,
            out_specs=out_specs,
            scratch_shapes=scratch_shapes),
        compiler_params=pltpu.CompilerParams(
            dimension_semantics=dim_sem,
            vmem_limit_bytes=vmem_limit),
        cost_estimate=cost,
    )(pred_p, gt_p)

    return jnp.sum(out)


def _reference_loss(pred, gt, alpha=5.0):
    # plain-JAX reference mirroring the PyTorch module
    d = jnp.sqrt(
        jnp.sum((pred[:, :, None, :] - gt[:, None, :, :]) ** 2, axis=-1))
    s = -alpha * d
    softmin_s_t = -jax.scipy.special.logsumexp(s, axis=1)   # (N, K)
    softmin_t_s = -jax.scipy.special.logsumexp(s, axis=2)   # (N, M)
    return softmin_s_t.mean() + softmin_t_s.mean()


if __name__ == "__main__":
    key = jax.random.PRNGKey(0)
    k1, k2, k3, k4 = jax.random.split(key, 4)

    # Case 1: typical small shapes (single K tile, specialized one-pass path).
    N, M, K = 2, 16, 24
    pred = jax.random.normal(k1, (N, M, 2), dtype=jnp.float32)
    gt = jax.random.normal(k2, (N, K, 2), dtype=jnp.float32)
    loss = jax.block_until_ready(soft_hausdorff_loss(pred, gt, alpha=5.0))
    ref = _reference_loss(pred, gt, alpha=5.0)
    assert jnp.allclose(loss, ref, rtol=1e-4, atol=1e-4), (loss, ref)

    # Case 2: exercises M/K/batch sentinel padding, batch chunking, and the
    # streaming multi-K-tile running-sum path.
    N2, M2, K2 = 3, 13, 200
    pred2 = jax.random.normal(k3, (N2, M2, 2), dtype=jnp.float32) * 3.0
    gt2 = jax.random.normal(k4, (N2, K2, 2), dtype=jnp.float32) * 3.0
    loss2 = jax.block_until_ready(
        soft_hausdorff_loss(pred2, gt2, alpha=5.0, block_b=2, block_k=128))
    ref2 = _reference_loss(pred2, gt2, alpha=5.0)
    assert jnp.allclose(loss2, ref2, rtol=1e-4, atol=1e-4), (loss2, ref2)

    print("KERNEL_OK")
</pallas_src>

<mosaic_0001>
module attributes {stable_mosaic.version = 11 : i64} {
  func.func @_soft_hausdorff_kernel(%arg0: i32, %arg1: memref<1x16x2xf32, #tpu.memory_space<vmem>>, %arg2: memref<1x2x128xf32, #tpu.memory_space<vmem>>, %arg3: memref<1x1x1xf32, #tpu.memory_space<vmem>>) attributes {dimension_semantics = [#tpu.dimension_semantics<parallel>], iteration_bounds = array<i64: 2>, scalar_prefetch = 0 : i64, scratch_operands = 0 : i64, tpu.core_type = #tpu.core_type<tc>, window_params = [{transform_indices = @transform_0, window_bounds = array<i64: 1, 16, 2>}, {transform_indices = @transform_1, window_bounds = array<i64: 1, 2, 128>}, {transform_indices = @transform_2, window_bounds = array<i64: 1, 1, 1>}]} {
    %c0 = arith.constant 0 : index
    %c0_0 = arith.constant 0 : index
    %c0_1 = arith.constant 0 : index
    %0 = vector.load %arg1[%c0, %c0_0, %c0_1] : memref<1x16x2xf32, #tpu.memory_space<vmem>>, vector<1x16x2xf32>
    %c0_2 = arith.constant 0 : index
    %c0_3 = arith.constant 0 : index
    %c0_4 = arith.constant 0 : index
    %1 = vector.load %arg2[%c0_2, %c0_3, %c0_4] : memref<1x2x128xf32, #tpu.memory_space<vmem>>, vector<1x2x128xf32>
    %2 = vector.extract_strided_slice %0 {offsets = [0, 0, 0], sizes = [1, 16, 1], strides = [1, 1, 1]} : vector<1x16x2xf32> to vector<1x16x1xf32>
    %3 = vector.extract_strided_slice %0 {offsets = [0, 0, 1], sizes = [1, 16, 1], strides = [1, 1, 1]} : vector<1x16x2xf32> to vector<1x16x1xf32>
    %4 = vector.extract_strided_slice %1 {offsets = [0, 0, 0], sizes = [1, 1, 128], strides = [1, 1, 1]} : vector<1x2x128xf32> to vector<1x1x128xf32>
    %5 = vector.extract_strided_slice %1 {offsets = [0, 1, 0], sizes = [1, 1, 128], strides = [1, 1, 1]} : vector<1x2x128xf32> to vector<1x1x128xf32>
    %6 = vector.broadcast %2 : vector<1x16x1xf32> to vector<1x16x128xf32>
    %7 = vector.broadcast %4 : vector<1x1x128xf32> to vector<1x16x128xf32>
    %8 = arith.subf %6, %7 : vector<1x16x128xf32>
    %9 = vector.broadcast %3 : vector<1x16x1xf32> to vector<1x16x128xf32>
    %10 = vector.broadcast %5 : vector<1x1x128xf32> to vector<1x16x128xf32>
    %11 = arith.subf %9, %10 : vector<1x16x128xf32>
    %12 = arith.mulf %8, %8 : vector<1x16x128xf32>
    %13 = arith.mulf %11, %11 : vector<1x16x128xf32>
    %14 = arith.addf %12, %13 : vector<1x16x128xf32>
    %15 = math.sqrt %14 : vector<1x16x128xf32>
    %cst = arith.constant 0.000000e+00 : f32
    %16 = vector.broadcast %cst : f32 to vector<1x16x128xf32>
    %17 = arith.subf %16, %15 : vector<1x16x128xf32>
    %18 = math.exp %17 : vector<1x16x128xf32>
    %cst_5 = arith.constant dense<0.000000e+00> : vector<1x128xf32>
    %19 = vector.multi_reduction <add>, %18, %cst_5 [1] : vector<1x16x128xf32> to vector<1x128xf32>
    %20 = vector.shape_cast %19 : vector<1x128xf32> to vector<1x1x128xf32>
    %cst_6 = arith.constant dense<0.000000e+00> : vector<1x16xf32>
    %21 = vector.multi_reduction <add>, %18, %cst_6 [2] : vector<1x16x128xf32> to vector<1x16xf32>
    %22 = vector.shape_cast %21 : vector<1x16xf32> to vector<1x16x1xf32>
    %23 = tpu.iota {dimensions = array<i32: 2>} : vector<1x1x128xi32>
    %c24_i32 = arith.constant 24 : i32
    %24 = vector.broadcast %c24_i32 : i32 to vector<1x1x128xi32>
    %25 = arith.cmpi slt, %23, %24 : vector<1x1x128xi32>
    %26 = math.log %20 : vector<1x1x128xf32>
    %cst_7 = arith.constant 0.000000e+00 : f32
    %27 = vector.broadcast %cst_7 : f32 to vector<1x1x128xf32>
    %28 = arith.select %25, %26, %27 : vector<1x1x128xi1>, vector<1x1x128xf32>
    %29 = math.log %22 : vector<1x16x1xf32>
    %cst_8 = arith.constant dense<0.000000e+00> : vector<1x1xf32>
    %30 = vector.multi_reduction <add>, %28, %cst_8 [2] : vector<1x1x128xf32> to vector<1x1xf32>
    %31 = vector.shape_cast %30 : vector<1x1xf32> to vector<1x1x1xf32>
    %cst_9 = arith.constant dense<0.000000e+00> : vector<1x1xf32>
    %32 = vector.multi_reduction <add>, %31, %cst_9 [1] : vector<1x1x1xf32> to vector<1x1xf32>
    %33 = vector.shape_cast %32 : vector<1x1xf32> to vector<1x1x1xf32>
    %cst_10 = arith.constant dense<0.000000e+00> : vector<1x1xf32>
    %34 = vector.multi_reduction <add>, %33, %cst_10 [0] : vector<1x1x1xf32> to vector<1x1xf32>
    %35 = vector.shape_cast %34 : vector<1x1xf32> to vector<1x1x1xf32>
    %cst_11 = arith.constant 0.020833334 : f32
    %36 = vector.broadcast %cst_11 : f32 to vector<1x1x1xf32>
    %37 = arith.mulf %35, %36 : vector<1x1x1xf32>
    %cst_12 = arith.constant dense<0.000000e+00> : vector<1x16xf32>
    %38 = vector.multi_reduction <add>, %29, %cst_12 [2] : vector<1x16x1xf32> to vector<1x16xf32>
    %39 = vector.shape_cast %38 : vector<1x16xf32> to vector<1x16x1xf32>
    %cst_13 = arith.constant dense<0.000000e+00> : vector<1x1xf32>
    %40 = vector.multi_reduction <add>, %39, %cst_13 [1] : vector<1x16x1xf32> to vector<1x1xf32>
    %41 = vector.shape_cast %40 : vector<1x1xf32> to vector<1x1x1xf32>
    %cst_14 = arith.constant dense<0.000000e+00> : vector<1x1xf32>
    %42 = vector.multi_reduction <add>, %41, %cst_14 [0] : vector<1x1x1xf32> to vector<1x1xf32>
    %43 = vector.shape_cast %42 : vector<1x1xf32> to vector<1x1x1xf32>
    %cst_15 = arith.constant 3.125000e-02 : f32
    %44 = vector.broadcast %cst_15 : f32 to vector<1x1x1xf32>
    %45 = arith.mulf %43, %44 : vector<1x1x1xf32>
    %46 = arith.addf %37, %45 : vector<1x1x1xf32>
    %cst_16 = arith.constant 0.000000e+00 : f32
    %47 = vector.broadcast %cst_16 : f32 to vector<1x1x1xf32>
    %48 = arith.subf %47, %46 : vector<1x1x1xf32>
    %c0_17 = arith.constant 0 : index
    %c0_18 = arith.constant 0 : index
    %c0_19 = arith.constant 0 : index
    %49 = vector.load %arg3[%c0_17, %c0_18, %c0_19] : memref<1x1x1xf32, #tpu.memory_space<vmem>>, vector<1x1x1xf32>
    tpu.vector_store %arg3[%c0_17, %c0_18, %c0_19], %48 {strides = array<i32>} : memref<1x1x1xf32, #tpu.memory_space<vmem>>, vector<1x1x1xf32>,
    return
  }
  func.func @transform_0(%arg0: i32) -> (i32, i32, i32) {
    %c0_i32 = arith.constant 0 : i32
    %c0_i32_0 = arith.constant 0 : i32
    %c0_i32_1 = arith.constant 0 : i32
    return %arg0, %c0_i32, %c0_i32_0 : i32, i32, i32
  }
  func.func @transform_1(%arg0: i32) -> (i32, i32, i32) {
    %c0_i32 = arith.constant 0 : i32
    %c0_i32_0 = arith.constant 0 : i32
    %c0_i32_1 = arith.constant 0 : i32
    return %arg0, %c0_i32, %c0_i32_0 : i32, i32, i32
  }
  func.func @transform_2(%arg0: i32) -> (i32, i32, i32) {
    %c0_i32 = arith.constant 0 : i32
    %c0_i32_0 = arith.constant 0 : i32
    %c0_i32_1 = arith.constant 0 : i32
    return %arg0, %c0_i32, %c0_i32_0 : i32, i32, i32
  }
}

</mosaic_0001>

<llo_original>
// kernel: tpu_custom_call.1
$region0: #{tpu_custom_call.1}
  #allocation0 [shape = 'u32[]', space=smem, size = 0x4, offset = 0x4, fixed_abs, tag = 'smem constant byte address 0x4 - core index']
  #allocation1 [shape = 'u32[144,128]{1,0:T(1,128)}', space=vmem, size = 0x12000, scoped, tag = 'internal scratch']
  %s0 = inlined_call_operand.vmem [shape: f32[2,16,2], index: 0, kind: input, shape index: {}]
  %s1 = inlined_call_operand.vmem [shape: f32[2,2,128], index: 1, kind: input, shape index: {}]
  %s2 = inlined_call_operand.vmem [shape: f32[2,1,1], index: 2, kind: output, shape index: {}]
  %s3 = sld [smem:[#allocation0]]
  $region41: #{tpu_custom_call.1} parent=0
    _
  %s5 = ssub.s32 1, %s3
  %s6 = scalar_select 0, %s5, %s3
  loop: start=0, step=1, limit=4
  $region2: #{tpu_custom_call.1} parent=0 // loop_pre_header
    _
  $region3: #{tpu_custom_call.1} parent=0 // loop_header
    %s8 = sphi 0, %s12
    %p9 = scmp.ge.s32.totalorder %s8, 4
    %s18 = sphi 0, %s20
    %s21 = sphi 0, %s18
    %s22 = sphi 0, %s21
    %s38 = sphi 0, %s22
    %s44 = sphi 0, %s46
    %s47 = sphi 0, %s44
    %s48 = sphi 0, %s47
    %s64 = sphi 0, %s48
    %s70 = sphi 0, %s72
    %s73 = sphi 0, %s70
    %s74 = sphi 0, %s73
    %s90 = sphi 0, %s74
  $region4: #{tpu_custom_call.1} parent=0 // loop_header_branch
    %11 = sbr.rel (%p9) target = $region8
  $region5: #{tpu_custom_call.1} parent=0 // loop_body
    %s13 = ssub.s32 %s8, 1
    %s14 = ssub.s32 %s8, 2
    %s15 = sadd.s32 %s8, 1
    %s16 = ssub.s32 %s8, %s15
    %p17 = scmp.eq.s32.totalorder %s16, 0
    %s19 = sadd.s32 %s18, 1
    %s20 = scalar_select %p17, %s18, %s19
    %p23 = pneg %p17
    %p24 = scmp.eq.s32.totalorder %s8, 1
    %p25 = por %p23, %p24
    %p26 = scmp.ne.s32.totalorder %s18, %s21
    %p27 = scmp.eq.s32.totalorder %s8, 0
    %p28 = por %p26, %p27
    %p29 = scmp.ne.s32.totalorder %s18, %s21
    %p30 = scmp.eq.s32.totalorder %s13, 1
    %p31 = por %p29, %p30
    %p32 = scmp.ne.s32.totalorder %s21, %s22
    %p33 = scmp.eq.s32.totalorder %s13, 0
    %p34 = por %p32, %p33
    %p35 = scmp.ne.s32.totalorder %s21, %s22
    %p36 = scmp.eq.s32.totalorder %s14, 1
    %p37 = por %p35, %p36
    %p39 = scmp.ne.s32.totalorder %s22, %s38
    %p40 = scmp.eq.s32.totalorder %s14, 0
    %p41 = por %p39, %p40
    %s42 = ssub.s32 %s8, %s15
    %p43 = scmp.eq.s32.totalorder %s42, 0
    %s45 = sadd.s32 %s44, 1
    %s46 = scalar_select %p43, %s44, %s45
    %p49 = pneg %p43
    %p50 = scmp.eq.s32.totalorder %s8, 1
    %p51 = por %p49, %p50
    %p52 = scmp.ne.s32.totalorder %s44, %s47
    %p53 = scmp.eq.s32.totalorder %s8, 0
    %p54 = por %p52, %p53
    %p55 = scmp.ne.s32.totalorder %s44, %s47
    %p56 = scmp.eq.s32.totalorder %s13, 1
    %p57 = por %p55, %p56
    %p58 = scmp.ne.s32.totalorder %s47, %s48
    %p59 = scmp.eq.s32.totalorder %s13, 0
    %p60 = por %p58, %p59
    %p61 = scmp.ne.s32.totalorder %s47, %s48
    %p62 = scmp.eq.s32.totalorder %s14, 1
    %p63 = por %p61, %p62
    %p65 = scmp.ne.s32.totalorder %s48, %s64
    %p66 = scmp.eq.s32.totalorder %s14, 0
    %p67 = por %p65, %p66
    %s68 = ssub.s32 %s8, %s15
    %p69 = scmp.eq.s32.totalorder %s68, 0
    %s71 = sadd.s32 %s70, 1
    %s72 = scalar_select %p69, %s70, %s71
    %p75 = pneg %p69
    %p76 = scmp.eq.s32.totalorder %s8, 1
    %p77 = por %p75, %p76
    %p78 = scmp.ne.s32.totalorder %s70, %s73
    %p79 = scmp.eq.s32.totalorder %s8, 0
    %p80 = por %p78, %p79
    %p81 = scmp.ne.s32.totalorder %s70, %s73
    %p82 = scmp.eq.s32.totalorder %s13, 1
    %p83 = por %p81, %p82
    %p84 = scmp.ne.s32.totalorder %s73, %s74
    %p85 = scmp.eq.s32.totalorder %s13, 0
    %p86 = por %p84, %p85
    %p87 = scmp.ne.s32.totalorder %s73, %s74
    %p88 = scmp.eq.s32.totalorder %s14, 1
    %p89 = por %p87, %p88
    %p91 = scmp.ne.s32.totalorder %s74, %s90
    %p92 = scmp.eq.s32.totalorder %s14, 0
    %p93 = por %p91, %p92
    %p94 = scmp.le.s32.totalorder 1, %s8
    %p95 = scmp.lt.s32.totalorder %s8, 3
    %p96 = pnand %p94, %p95
    %p97 = pneg %p96
    // Predicated region
    $region9: #{tpu_custom_call.1} parent=5 // pred_check
      _
    $region10: #{tpu_custom_call.1} parent=5 // pred_check_branch
      %99 = sbr.rel (%p96) target = $region12
    $region11: #{tpu_custom_call.1} parent=5 // pred_region
      %s100 = ssub.s32 %s8, 1
    $region12: #{tpu_custom_call.1} parent=5 // pred_fallthru
      _
    %p101 = scmp.lt.s32.totalorder %s8, 2
    // Predicated region
    $region13: #{tpu_custom_call.1} parent=5 // pred_check
      %p102 = pneg %p101
    $region14: #{tpu_custom_call.1} parent=5 // pred_check_branch
      %104 = sbr.rel (%p102) target = $region16
    $region15: #{tpu_custom_call.1} parent=5 // pred_region
      // Predicated region
      $region17: #{tpu_custom_call.1} parent=15 // pred_check
        %p105 = pneg %p28
      $region18: #{tpu_custom_call.1} parent=15 // pred_check_branch
        %107 = sbr.rel (%p105) target = $region20
      $region19: #{tpu_custom_call.1} parent=15 // pred_region
        %p108 = scmp.lt.s32.totalorder %s8, 1
        %s109 = scalar_select %p108, %s8, 1
        %s110 = smul.addr %s109, 2
        %s111 = smul.addr %s110, 8
        %s112 = scalar_lea.vmem %s0, %s111
      $region20: #{tpu_custom_call.1} parent=15 // pred_fallthru
        _
      // Predicated region
      $region21: #{tpu_custom_call.1} parent=15 // pred_check
        %p113 = pneg %p54
      $region22: #{tpu_custom_call.1} parent=15 // pred_check_branch
        %115 = sbr.rel (%p113) target = $region24
      $region23: #{tpu_custom_call.1} parent=15 // pred_region
        %p116 = scmp.lt.s32.totalorder %s8, 1
        %s117 = scalar_select %p116, %s8, 1
        %s118 = smul.addr %s117, 2
        %s119 = scalar_lea.vmem %s1, %s118
      $region24: #{tpu_custom_call.1} parent=15 // pred_fallthru
        _
    $region16: #{tpu_custom_call.1} parent=5 // pred_fallthru
      _
    %p120 = scmp.le.s32.totalorder 1, %s8
    %p121 = scmp.lt.s32.totalorder %s8, 3
    %p122 = pnand %p120, %p121
    %p123 = pneg %p122
    // Predicated region
    $region25: #{tpu_custom_call.1} parent=5 // pred_check
      _
    $region26: #{tpu_custom_call.1} parent=5 // pred_check_branch
      %125 = sbr.rel (%p122) target = $region28
    $region27: #{tpu_custom_call.1} parent=5 // pred_region
      %s126 = ssub.s32 %s8, 1
      %p127 = scmp.lt.s32.totalorder %s13, 1
      %s128 = scalar_select %p127, %s13, 1
      %s129 = smul.addr %s128, 2
      %s130 = smul.addr %s129, 8
      %s131 = scalar_lea.vmem %s0, %s130
      %p132 = pneg %p34
      %p133 = pneg %p31
      %p134 = scmp.lt.s32.totalorder %s13, 1
      %s135 = scalar_select %p134, %s13, 1
      %s136 = smul.addr %s135, 2
      %s137 = scalar_lea.vmem %s1, %s136
      %p138 = pneg %p60
      %p139 = pneg %p57
      %p140 = pneg %p86
      %p141 = pneg %p83
      %p142 = scmp.lt.s32.totalorder %s13, 1
      %s143 = scalar_select %p142, %s13, 1
      %s144 = scalar_lea.vmem %s2, %s143
      %p145 = scmp.lt.s32.totalorder %s13, 1
      %s146 = scalar_select %p145, %s13, 1
      %s147 = smul.addr %s146, 2
      %s148 = smul.addr %s147, 8
      %s149 = scalar_lea.vmem %s0, %s148
      %p150 = scmp.lt.s32.totalorder %s13, 1
      %s151 = scalar_select %p150, %s13, 1
      %s152 = smul.addr %s151, 2
      %s153 = scalar_lea.vmem %s1, %s152
      %p154 = scmp.lt.s32.totalorder %s13, 1
      %s155 = scalar_select %p154, %s13, 1
      %s156 = scalar_lea.vmem %s2, %s155
      %v157 = vld [vmem:[%s149] sm:$0xff]
      %v158 = vld [vmem:[%s149 + $0x8] sm:$0xff]
      %v159 = vld [vmem:[%s153] sm:$0x3]
      %161 = vset.pattern.permute.xlu0 0
      %162 = vperm.xlu0 %161, %v157
      %v163 = vpop.permute.xlu0 %162
      %166 = vset.pattern.permute.xlu0 0
      %167 = vperm.xlu0 %166, %v158
      %v168 = vpop.permute.xlu0 %167
      %v170 = vlaneseq
      %v171 = vshrl.u32 %v170, 7
      %v172 = vsub.s32 0, %v171
      %v173 = vrot.slane %v159, %v172
      %v174 = vsub.f32 %v163, %v173
      %v175 = vsub.f32 %v168, %v173
      %176 = vset.pattern.permute.xlu0 1
      %177 = vperm.xlu0 %176, %v157
      %v178 = vpop.permute.xlu0 %177
      %180 = vset.pattern.permute.xlu0 1
      %181 = vperm.xlu0 %180, %v158
      %v182 = vpop.permute.xlu0 %181
      %v184 = vlaneseq
      %v185 = vshrl.u32 %v184, 7
      %v186 = vsub.s32 1, %v185
      %v187 = vrot.slane %v159, %v186
      %v188 = vsub.f32 %v178, %v187
      %v189 = vsub.f32 %v182, %v187
      %v190 = vmul.f32 %v174, %v174
      %v191 = vmul.f32 %v175, %v175
      %v192 = vmul.f32 %v188, %v188
      %v193 = vmul.f32 %v189, %v189
      %v194 = vadd.f32 %v190, %v192
      %v195 = vadd.f32 %v191, %v193
      %v196 = vrsqrt.pop %v194
      %v197 = vmul.f32 %v194, %v196
      %vm198 = vcmp.eq.f32.partialorder %v194, inf
      %v199 = vsel %vm198, %v194, %v197
      %vm200 = vcmp.eq.f32.partialorder %v194, 0.0
      %v201 = vand.u32 %v194, 2147483648
      %v202 = vsel %vm200, %v201, %v199
      %v203 = vrsqrt.pop %v195
      %v204 = vmul.f32 %v195, %v203
      %vm205 = vcmp.eq.f32.partialorder %v195, inf
      %v206 = vsel %vm205, %v195, %v204
      %vm207 = vcmp.eq.f32.partialorder %v195, 0.0
      %v208 = vand.u32 %v195, 2147483648
      %v209 = vsel %vm207, %v208, %v206
      %v210 = vsub.f32 0.0, %v202
      %v211 = vsub.f32 0.0, %v209
      %v212 = vmul.f32 %v210, 1.442695
      %v213 = vpow.pop %v212
      %v214 = vmul.f32 %v211, 1.442695
      %v215 = vpow.pop %v214
      %v216 = vadd.f32 %v213, %v215
      %v217 = vrot.slane %v216, 4
      %v218 = vadd.f32 %v216, %v217
      %v219 = vrot.slane %v218, 2
      %v220 = vadd.f32 %v218, %v219
      %v221 = vrot.slane %v220, 1
      %v222 = vadd.f32 %v220, %v221
      %223 = vadd.xlane.f32.xlu0 %v213
      %v224 = vpop.xlane.xlu0 %223
      %225 = vadd.xlane.f32.xlu0 %v215
      %v226 = vpop.xlane.xlu0 %225
      %v227 = vlaneseq
      %v228 = vand.u32 %v227, 127
      %vm229 = vcmp.lt.s32.totalorder %v228, 24
      %v230 = vlog2.pop %v222
      %v231 = vmul.f32 %v230, 0.6931472
      %v232 = vsel %vm229, %v231, 0.0
      %v233 = vlog2.pop %v224
      %v234 = vmul.f32 %v233, 0.6931472
      %v235 = vlog2.pop %v226
      %v236 = vmul.f32 %v235, 0.6931472
      %237 = vadd.xlane.f32.xlu0 %v232
      %v238 = vpop.xlane.xlu0 %237
      %v239 = vadd.f32 %v238, 0.0
      %v240 = vadd.f32 %v239, 0.0
      %v241 = vmul.f32 %v240, 0.020833334
      %v242 = vadd.f32 %v234, 0.0
      %v243 = vadd.f32 %v236, 0.0
      %v244 = vadd.f32 %v242, %v243
      %v245 = vrot.slane %v244, 4
      %v246 = vadd.f32 %v244, %v245
      %v247 = vrot.slane %v246, 2
      %v248 = vadd.f32 %v246, %v247
      %v249 = vrot.slane %v248, 1
      %v250 = vadd.f32 %v248, %v249
      %v251 = vadd.f32 %v250, 0.0
      %v252 = vmul.f32 %v251, 0.03125
      %v253 = vadd.f32 %v241, %v252
      %v254 = vsub.f32 0.0, %v253
      %vm255 = vcmask 0
      %256 = vst.msk [vmem:[%s156] sm:$0x1] %vm255, %v254
      %p257 = scmp.lt.s32.totalorder %s13, 1
      %s258 = scalar_select %p257, %s13, 1
      %s259 = scalar_lea.vmem %s2, %s258
      // Predicated region
      $region29: #{tpu_custom_call.1} parent=27 // pred_check
        %p260 = pneg %p83
      $region30: #{tpu_custom_call.1} parent=27 // pred_check_branch
        %262 = sbr.rel (%p260) target = $region32
      $region31: #{tpu_custom_call.1} parent=27 // pred_region
        _
      $region32: #{tpu_custom_call.1} parent=27 // pred_fallthru
        _
    $region28: #{tpu_custom_call.1} parent=5 // pred_fallthru
      _
    %p263 = scmp.le.s32.totalorder 2, %s8
    // Predicated region
    $region33: #{tpu_custom_call.1} parent=5 // pred_check
      %p264 = pneg %p263
    $region34: #{tpu_custom_call.1} parent=5 // pred_check_branch
      %266 = sbr.rel (%p264) target = $region36
    $region35: #{tpu_custom_call.1} parent=5 // pred_region
      %s267 = ssub.s32 %s8, 2
      // Predicated region
      $region37: #{tpu_custom_call.1} parent=35 // pred_check
        %p268 = pneg %p89
      $region38: #{tpu_custom_call.1} parent=35 // pred_check_branch
        %270 = sbr.rel (%p268) target = $region40
      $region39: #{tpu_custom_call.1} parent=35 // pred_region
        %p271 = scmp.lt.s32.totalorder %s14, 1
        %s272 = scalar_select %p271, %s14, 1
        %s273 = scalar_lea.vmem %s2, %s272
      $region40: #{tpu_custom_call.1} parent=35 // pred_fallthru
        _
    $region36: #{tpu_custom_call.1} parent=5 // pred_fallthru
      _
  $region6: #{tpu_custom_call.1} parent=0 // loop_footer
    %s12 = sadd.s32 1, %s8
  $region7: #{tpu_custom_call.1} parent=0 // loop_footer_branch
    %7 = sbr.rel target = $region3
  $region8: #{tpu_custom_call.1} parent=0 // loop_exit
    _

</llo_original>
